<compile_context>
chip_gen: v7x
topology: tpu7x:2x2x1
jax: 0.10.0
libtpu: 0.0.40
codegen_flags: <defaults>
</compile_context>

<pallas_src>
import functools
import math

import jax
import jax.numpy as jnp
from jax.experimental import pallas as pl
from jax.experimental.pallas import tpu as pltpu


_LANE = 128          # lane width for the (small) latent tensors
_MSE_LANES = 1024    # lane-dense width for the streamed MSE operands
_MAX_TILE_ROWS = 256 # 256 x 1024 f32 = 1 MiB / input / buffer


def _round_up(v, m):
    return ((v + m - 1) // m) * m


def _vae_loss_kernel(recon_ref, x_ref, mu_ref, logvar_ref, out_ref, acc_ref,
                     *, inv_n):
    k = pl.program_id(0)

    @pl.when(k == 0)
    def _init():
        acc_ref[0, 0] = 0.0

    # Streaming squared-error partial sum for this tile (f32 accumulation).
    diff = recon_ref[...].astype(jnp.float32) - x_ref[...].astype(jnp.float32)
    acc_ref[0, 0] += jnp.sum(diff * diff)

    # Epilogue: latents are resident (same block every step) -> compute KLD once.
    @pl.when(k == pl.num_programs(0) - 1)
    def _finish():
        mu = mu_ref[...].astype(jnp.float32)
        logvar = logvar_ref[...].astype(jnp.float32)
        kld = -0.5 * jnp.sum(1.0 + logvar - mu * mu - jnp.exp(logvar))
        out_ref[0, 0] = acc_ref[0, 0] * inv_n + kld


def _to_lane_dense(a, lanes, row_multiple):
    """Flatten, zero-pad, and reshape to (rows, lanes), rows % row_multiple == 0."""
    flat = a.reshape(-1)
    n = flat.shape[0]
    rows = _round_up(max(pl.cdiv(n, lanes), 1), row_multiple)
    padded = rows * lanes
    if padded != n:
        flat = jnp.pad(flat, (0, padded - n))
    return flat.reshape(rows, lanes)


def custom_loss(recon, x, mu, logvar):
    """Pallas equivalent of customLoss.forward. Returns a scalar float32."""
    assert recon.shape == x.shape
    assert mu.shape == logvar.shape

    n_mse = math.prod(recon.shape)   # original element counts (NOT padded)
    n_lat = math.prod(mu.shape)

    # Lane-dense slabs (zero padding is loss-neutral for both terms).
    recon2d = _to_lane_dense(recon, _MSE_LANES, 8)
    x2d = _to_lane_dense(x, _MSE_LANES, 8)
    rows = recon2d.shape[0]
    tile_rows = min(_MAX_TILE_ROWS, rows)
    if rows % tile_rows != 0:
        rows_p = _round_up(rows, tile_rows)
        recon2d = jnp.pad(recon2d, ((0, rows_p - rows), (0, 0)))
        x2d = jnp.pad(x2d, ((0, rows_p - rows), (0, 0)))
        rows = rows_p
    grid = (rows // tile_rows,)

    mu2d = _to_lane_dense(mu, _LANE, 8)
    logvar2d = _to_lane_dense(logvar, _LANE, 8)
    lat_rows = mu2d.shape[0]

    kernel = functools.partial(_vae_loss_kernel, inv_n=1.0 / float(n_mse))

    itemsize = jnp.dtype(recon.dtype).itemsize
    cost = pl.CostEstimate(
        flops=3 * n_mse + 6 * n_lat,
        transcendentals=n_lat,
        bytes_accessed=2 * n_mse * itemsize
        + 2 * n_lat * jnp.dtype(mu.dtype).itemsize
        + 4,
    )

    out = pl.pallas_call(
        kernel,
        out_shape=jax.ShapeDtypeStruct((1, 1), jnp.float32),
        grid=grid,
        in_specs=[
            pl.BlockSpec((tile_rows, _MSE_LANES), lambda k: (k, 0)),
            pl.BlockSpec((tile_rows, _MSE_LANES), lambda k: (k, 0)),
            # Latents stay resident across the whole grid (no per-step re-DMA).
            pl.BlockSpec((lat_rows, _LANE), lambda k: (0, 0)),
            pl.BlockSpec((lat_rows, _LANE), lambda k: (0, 0)),
        ],
        out_specs=pl.BlockSpec((1, 1), lambda k: (0, 0),
                               memory_space=pltpu.SMEM),
        scratch_shapes=[pltpu.SMEM((1, 1), jnp.float32)],
        compiler_params=pltpu.CompilerParams(
            dimension_semantics=("arbitrary",),
        ),
        cost_estimate=cost,
    )(recon2d, x2d, mu2d, logvar2d)
    return out[0, 0]


def _reference(recon, x, mu, logvar):
    loss_mse = jnp.mean((recon.astype(jnp.float32) - x.astype(jnp.float32)) ** 2)
    lv = logvar.astype(jnp.float32)
    m = mu.astype(jnp.float32)
    loss_kld = -0.5 * jnp.sum(1.0 + lv - m * m - jnp.exp(lv))
    return loss_mse + loss_kld


if __name__ == "__main__":
    key = jax.random.PRNGKey(0)

    # --- Small shapes matching the DenseVAE's flattened outputs ---
    k1, k2, k3, k4 = jax.random.split(key, 4)
    B, D, L = 2, 256, 32
    recon = jax.random.normal(k1, (B, D), dtype=jnp.float32)
    x = jax.random.normal(k2, (B, D), dtype=jnp.float32)
    mu = jax.random.normal(k3, (B, L), dtype=jnp.float32) * 0.5
    logvar = jax.random.normal(k4, (B, L), dtype=jnp.float32) * 0.1

    out = custom_loss(recon, x, mu, logvar)
    jax.block_until_ready(out)
    ref = _reference(recon, x, mu, logvar)
    assert jnp.allclose(out, ref, rtol=1e-4, atol=1e-4), (out, ref)

    # --- Larger case that exercises the multi-step reduction grid + epilogue ---
    k5, k6, k7, k8 = jax.random.split(jax.random.PRNGKey(1), 4)
    B2, D2, L2 = 64, 8192, 32
    recon2 = jax.random.normal(k5, (B2, D2), dtype=jnp.float32)
    x2 = jax.random.normal(k6, (B2, D2), dtype=jnp.float32)
    mu2 = jax.random.normal(k7, (B2, L2), dtype=jnp.float32) * 0.5
    logvar2 = jax.random.normal(k8, (B2, L2), dtype=jnp.float32) * 0.1

    out2 = custom_loss(recon2, x2, mu2, logvar2)
    jax.block_until_ready(out2)
    ref2 = _reference(recon2, x2, mu2, logvar2)
    assert jnp.allclose(out2, ref2, rtol=1e-4, atol=1e-4), (out2, ref2)

    print("KERNEL_OK")
</pallas_src>

<mosaic_0001>
module attributes {stable_mosaic.version = 11 : i64} {
  func.func @_vae_loss_kernel(%arg0: i32, %arg1: memref<8x1024xf32, #tpu.memory_space<vmem>>, %arg2: memref<8x1024xf32, #tpu.memory_space<vmem>>, %arg3: memref<8x128xf32, #tpu.memory_space<vmem>>, %arg4: memref<8x128xf32, #tpu.memory_space<vmem>>, %arg5: memref<1x1xf32, #tpu.memory_space<smem>>, %arg6: memref<1x1xf32, #tpu.memory_space<smem>>) attributes {dimension_semantics = [#tpu.dimension_semantics<arbitrary>], iteration_bounds = array<i64: 1>, scalar_prefetch = 0 : i64, scratch_operands = 1 : i64, tpu.core_type = #tpu.core_type<tc>, window_params = [{transform_indices = @transform_0, window_bounds = array<i64: 8, 1024>}, {transform_indices = @transform_1, window_bounds = array<i64: 8, 1024>}, {pipeline_mode = #tpu.pipeline_mode<synchronous>, transform_indices = @transform_2, window_bounds = array<i64: 8, 128>}, {pipeline_mode = #tpu.pipeline_mode<synchronous>, transform_indices = @transform_3, window_bounds = array<i64: 8, 128>}, {transform_indices = @transform_4, window_bounds = array<i64: 1, 1>}]} {
    %c0_i32 = arith.constant 0 : i32
    %0 = arith.cmpi eq, %arg0, %c0_i32 : i32
    %1 = arith.extui %0 : i1 to i32
    %c0_i32_0 = arith.constant 0 : i32
    %2 = arith.cmpi ne, %1, %c0_i32_0 : i32
    scf.if %2 {
      %cst_10 = arith.constant 0.000000e+00 : f32
      %c0_11 = arith.constant 0 : index
      %c0_12 = arith.constant 0 : index
      %17 = memref.load %arg6[%c0_11, %c0_12] : memref<1x1xf32, #tpu.memory_space<smem>>
      memref.store %cst_10, %arg6[%c0_11, %c0_12] : memref<1x1xf32, #tpu.memory_space<smem>>
    } else {
    }
    %c0 = arith.constant 0 : index
    %c0_1 = arith.constant 0 : index
    %3 = vector.load %arg1[%c0, %c0_1] : memref<8x1024xf32, #tpu.memory_space<vmem>>, vector<8x1024xf32>
    %c0_2 = arith.constant 0 : index
    %c0_3 = arith.constant 0 : index
    %4 = vector.load %arg2[%c0_2, %c0_3] : memref<8x1024xf32, #tpu.memory_space<vmem>>, vector<8x1024xf32>
    %5 = arith.subf %3, %4 : vector<8x1024xf32>
    %c0_4 = arith.constant 0 : index
    %c0_5 = arith.constant 0 : index
    %6 = memref.load %arg6[%c0_4, %c0_5] : memref<1x1xf32, #tpu.memory_space<smem>>
    %7 = arith.mulf %5, %5 : vector<8x1024xf32>
    %8 = vector.shape_cast %7 : vector<8x1024xf32> to vector<1x8x1024xf32>
    %cst = arith.constant dense<0.000000e+00> : vector<1xf32>
    %9 = vector.multi_reduction <add>, %8, %cst [1, 2] : vector<1x8x1024xf32> to vector<1xf32>
    %10 = vector.shape_cast %9 : vector<1xf32> to vector<1x1x1xf32>
    %11 = vector.extract %10[0, 0, 0] : f32 from vector<1x1x1xf32>
    %12 = arith.addf %6, %11 : f32
    %c0_6 = arith.constant 0 : index
    %c0_7 = arith.constant 0 : index
    %13 = memref.load %arg6[%c0_6, %c0_7] : memref<1x1xf32, #tpu.memory_space<smem>>
    memref.store %12, %arg6[%c0_6, %c0_7] : memref<1x1xf32, #tpu.memory_space<smem>>
    %c0_i32_8 = arith.constant 0 : i32
    %14 = arith.cmpi eq, %arg0, %c0_i32_8 : i32
    %15 = arith.extui %14 : i1 to i32
    %c0_i32_9 = arith.constant 0 : i32
    %16 = arith.cmpi ne, %15, %c0_i32_9 : i32
    scf.if %16 {
      %c0_10 = arith.constant 0 : index
      %c0_11 = arith.constant 0 : index
      %17 = vector.load %arg3[%c0_10, %c0_11] : memref<8x128xf32, #tpu.memory_space<vmem>>, vector<8x128xf32>
      %c0_12 = arith.constant 0 : index
      %c0_13 = arith.constant 0 : index
      %18 = vector.load %arg4[%c0_12, %c0_13] : memref<8x128xf32, #tpu.memory_space<vmem>>, vector<8x128xf32>
      %cst_14 = arith.constant 1.000000e+00 : f32
      %19 = vector.broadcast %cst_14 : f32 to vector<8x128xf32>
      %20 = arith.addf %19, %18 : vector<8x128xf32>
      %21 = arith.mulf %17, %17 : vector<8x128xf32>
      %22 = arith.subf %20, %21 : vector<8x128xf32>
      %23 = math.exp %18 : vector<8x128xf32>
      %24 = arith.subf %22, %23 : vector<8x128xf32>
      %25 = vector.shape_cast %24 : vector<8x128xf32> to vector<1x8x128xf32>
      %cst_15 = arith.constant dense<0.000000e+00> : vector<1xf32>
      %26 = vector.multi_reduction <add>, %25, %cst_15 [1, 2] : vector<1x8x128xf32> to vector<1xf32>
      %27 = vector.shape_cast %26 : vector<1xf32> to vector<1x1x1xf32>
      %28 = vector.extract %27[0, 0, 0] : f32 from vector<1x1x1xf32>
      %cst_16 = arith.constant -5.000000e-01 : f32
      %29 = arith.mulf %cst_16, %28 : f32
      %c0_17 = arith.constant 0 : index
      %c0_18 = arith.constant 0 : index
      %30 = memref.load %arg6[%c0_17, %c0_18] : memref<1x1xf32, #tpu.memory_space<smem>>
      %cst_19 = arith.constant 0.001953125 : f32
      %31 = arith.mulf %30, %cst_19 : f32
      %32 = arith.addf %31, %29 : f32
      %c0_20 = arith.constant 0 : index
      %c0_21 = arith.constant 0 : index
      %33 = memref.load %arg5[%c0_20, %c0_21] : memref<1x1xf32, #tpu.memory_space<smem>>
      memref.store %32, %arg5[%c0_20, %c0_21] : memref<1x1xf32, #tpu.memory_space<smem>>
    } else {
    }
    return
  }
  func.func @transform_0(%arg0: i32) -> (i32, i32) {
    %c0_i32 = arith.constant 0 : i32
    %c0_i32_0 = arith.constant 0 : i32
    return %arg0, %c0_i32 : i32, i32
  }
  func.func @transform_1(%arg0: i32) -> (i32, i32) {
    %c0_i32 = arith.constant 0 : i32
    %c0_i32_0 = arith.constant 0 : i32
    return %arg0, %c0_i32 : i32, i32
  }
  func.func @transform_2(%arg0: i32) -> (i32, i32) {
    %c0_i32 = arith.constant 0 : i32
    %c0_i32_0 = arith.constant 0 : i32
    %c0_i32_1 = arith.constant 0 : i32
    return %c0_i32, %c0_i32_0 : i32, i32
  }
  func.func @transform_3(%arg0: i32) -> (i32, i32) {
    %c0_i32 = arith.constant 0 : i32
    %c0_i32_0 = arith.constant 0 : i32
    %c0_i32_1 = arith.constant 0 : i32
    return %c0_i32, %c0_i32_0 : i32, i32
  }
  func.func @transform_4(%arg0: i32) -> (i32, i32) {
    %c0_i32 = arith.constant 0 : i32
    %c0_i32_0 = arith.constant 0 : i32
    %c0_i32_1 = arith.constant 0 : i32
    return %c0_i32, %c0_i32_0 : i32, i32
  }
}

</mosaic_0001>

<llo_original>
// kernel: tpu_custom_call.1
$region0: #{tpu_custom_call.1}
  #allocation0 [shape = 'u32[]', space=smem, size = 0x4, offset = 0x4, fixed_abs, tag = 'smem constant byte address 0x4 - core index']
  #allocation1 [shape = 'u32[144,128]{1,0:T(1,128)}', space=vmem, size = 0x12000, scoped, tag = 'internal scratch']
  #allocation2 [shape = 'f32[1,1]{1,0:T(1,128)}', space=smem, size = 0x200, scoped, tag = 'scratch operand']
  %s0 = inlined_call_operand.hbm [shape: f32[8,1024], index: 0, kind: input, shape index: {}]
  %s1 = inlined_call_operand.hbm [shape: f32[8,1024], index: 1, kind: input, shape index: {}]
  %s2 = inlined_call_operand.hbm [shape: f32[8,128], index: 2, kind: input, shape index: {}]
  %s3 = inlined_call_operand.vmem [shape: f32[8,128], index: 3, kind: input, shape index: {}]
  %s4 = inlined_call_operand.hbm [shape: f32[1,1], index: 4, kind: output, shape index: {}]
  %s5 = sld [smem:[#allocation0]]
  $region46: #{tpu_custom_call.1} parent=0
    _
  %s7 = ssub.s32 1, %s5
  %s8 = scalar_select 0, %s7, %s5
  $region1: #{tpu_custom_call.1} parent=0
    #allocation3 [shape = 'u8[32768]{0}', space=vmem, size = 0x8000, scoped, tag = 'input window, operand 0, single buffered']
    #allocation4 [shape = 's32[1]{0}', space=sflag, size = 0x4, scoped, tag = 'scoped memory for tpu_custom_call.1']
    #allocation5 [shape = 's32[1]{0}', space=sflag, size = 0x4, scoped, tag = 'scoped memory for tpu_custom_call.1']
    #allocation6 [shape = 'u8[32768]{0}', space=vmem, size = 0x8000, scoped, tag = 'input window, operand 1, single buffered']
    #allocation7 [shape = 's32[1]{0}', space=sflag, size = 0x4, scoped, tag = 'scoped memory for tpu_custom_call.1']
    #allocation8 [shape = 'u8[4096]{0}', space=vmem, size = 0x1000, scoped, tag = 'input window, operand 2, single buffered']
    #allocation9 [shape = 'u8[512]{0}', space=smem, size = 0x200, scoped, tag = 'output window, operand 0, single buffered']
    %9 = vsyncpa [#allocation4], 0
    %10 = vsyncpa [#allocation7], 0
    %11 = vsyncpa [#allocation5], 0
    // Predicated region
    $region2: #{tpu_custom_call.1} parent=1 // pred_check
      _
    $region3: #{tpu_custom_call.1} parent=1 // pred_check_branch
      %13 = sbr.rel (0) target = $region5
    $region4: #{tpu_custom_call.1} parent=1 // pred_region
      %s15 = ssub.s32 1024, 1024
      %16 = vsyncadd [#allocation4], %s15
      %s18 = sshll.u32 [#allocation3], 4
      %s19 = int_to_ptr.vmem [resolvable:$true] %s18
      %21 = dma.hbm_to_vmem [thread:$0]  %s0, 1024, %s19, [#allocation4]
    $region5: #{tpu_custom_call.1} parent=1 // pred_fallthru
      _
    // Predicated region
    $region6: #{tpu_custom_call.1} parent=1 // pred_check
      _
    $region7: #{tpu_custom_call.1} parent=1 // pred_check_branch
      %23 = sbr.rel (0) target = $region9
    $region8: #{tpu_custom_call.1} parent=1 // pred_region
      %s25 = ssub.s32 1024, 1024
      %26 = vsyncadd [#allocation7], %s25
      %s28 = sshll.u32 [#allocation6], 4
      %s29 = int_to_ptr.vmem [resolvable:$true] %s28
      %31 = dma.hbm_to_vmem [thread:$0]  %s1, 1024, %s29, [#allocation7]
    $region9: #{tpu_custom_call.1} parent=1 // pred_fallthru
      _
    // Predicated region
    $region10: #{tpu_custom_call.1} parent=1 // pred_check
      _
    $region11: #{tpu_custom_call.1} parent=1 // pred_check_branch
      %33 = sbr.rel (0) target = $region13
    $region12: #{tpu_custom_call.1} parent=1 // pred_region
      %s35 = ssub.s32 128, 128
      %36 = vsyncadd [#allocation7], %s35
      %s38 = sshll.u32 [#allocation8], 4
      %s39 = int_to_ptr.vmem [resolvable:$true] %s38
      %41 = dma.hbm_to_vmem [thread:$0]  %s2, 128, %s39, [#allocation7]
    $region13: #{tpu_custom_call.1} parent=1 // pred_fallthru
      _
    // Predicated region
    $region14: #{tpu_custom_call.1} parent=1 // pred_check
      _
    $region15: #{tpu_custom_call.1} parent=1 // pred_check_branch
      %43 = sbr.rel (0) target = $region17
    $region16: #{tpu_custom_call.1} parent=1 // pred_region
      _
    $region17: #{tpu_custom_call.1} parent=1 // pred_fallthru
      _
    // Predicated region
    $region18: #{tpu_custom_call.1} parent=1 // pred_check
      _
    $region19: #{tpu_custom_call.1} parent=1 // pred_check_branch
      %45 = sbr.rel (0) target = $region21
    $region20: #{tpu_custom_call.1} parent=1 // pred_region
      %46 = dma.done [#allocation4], 1024
    $region21: #{tpu_custom_call.1} parent=1 // pred_fallthru
      _
    // Predicated region
    $region22: #{tpu_custom_call.1} parent=1 // pred_check
      _
    $region23: #{tpu_custom_call.1} parent=1 // pred_check_branch
      %48 = sbr.rel (0) target = $region25
    $region24: #{tpu_custom_call.1} parent=1 // pred_region
      %49 = dma.done [#allocation7], 1024
    $region25: #{tpu_custom_call.1} parent=1 // pred_fallthru
      _
    // Predicated region
    $region26: #{tpu_custom_call.1} parent=1 // pred_check
      _
    $region27: #{tpu_custom_call.1} parent=1 // pred_check_branch
      %51 = sbr.rel (0) target = $region29
    $region28: #{tpu_custom_call.1} parent=1 // pred_region
      %52 = dma.done [#allocation7], 128
    $region29: #{tpu_custom_call.1} parent=1 // pred_fallthru
      _
    %p53 = scmp.eq.s32.totalorder 0, 0
    // Predicated region
    $region30: #{tpu_custom_call.1} parent=1 // pred_check
      %p54 = pneg %p53
    $region31: #{tpu_custom_call.1} parent=1 // pred_check_branch
      %56 = sbr.rel (%p54) target = $region33
    $region32: #{tpu_custom_call.1} parent=1 // pred_region
      %s57 = scalar_lea.smem [#allocation2], 0
      %58 = sst [smem:[%s57]] 0.0
    $region33: #{tpu_custom_call.1} parent=1 // pred_fallthru
      _
    %v59 = vld [vmem:[#allocation3] sm:$0xff]
    %v60 = vld [vmem:[#allocation3 + $0x8] sm:$0xff]
    %v61 = vld [vmem:[#allocation3 + $0x10] sm:$0xff]
    %v62 = vld [vmem:[#allocation3 + $0x18] sm:$0xff]
    %v63 = vld [vmem:[#allocation3 + $0x20] sm:$0xff]
    %v64 = vld [vmem:[#allocation3 + $0x28] sm:$0xff]
    %v65 = vld [vmem:[#allocation3 + $0x30] sm:$0xff]
    %v66 = vld [vmem:[#allocation3 + $0x38] sm:$0xff]
    %v67 = vld [vmem:[#allocation6] sm:$0xff]
    %v68 = vld [vmem:[#allocation6 + $0x8] sm:$0xff]
    %v69 = vld [vmem:[#allocation6 + $0x10] sm:$0xff]
    %v70 = vld [vmem:[#allocation6 + $0x18] sm:$0xff]
    %v71 = vld [vmem:[#allocation6 + $0x20] sm:$0xff]
    %v72 = vld [vmem:[#allocation6 + $0x28] sm:$0xff]
    %v73 = vld [vmem:[#allocation6 + $0x30] sm:$0xff]
    %v74 = vld [vmem:[#allocation6 + $0x38] sm:$0xff]
    %v75 = vsub.f32 %v59, %v67
    %v76 = vsub.f32 %v60, %v68
    %v77 = vsub.f32 %v61, %v69
    %v78 = vsub.f32 %v62, %v70
    %v79 = vsub.f32 %v63, %v71
    %v80 = vsub.f32 %v64, %v72
    %v81 = vsub.f32 %v65, %v73
    %v82 = vsub.f32 %v66, %v74
    %s83 = sld [smem:[#allocation2]]
    %v84 = vmul.f32 %v75, %v75
    %v85 = vmul.f32 %v76, %v76
    %v86 = vmul.f32 %v77, %v77
    %v87 = vmul.f32 %v78, %v78
    %v88 = vmul.f32 %v79, %v79
    %v89 = vmul.f32 %v80, %v80
    %v90 = vmul.f32 %v81, %v81
    %v91 = vmul.f32 %v82, %v82
    %v92 = vadd.f32 %v84, %v85
    %v93 = vadd.f32 %v92, %v86
    %v94 = vadd.f32 %v93, %v87
    %v95 = vadd.f32 %v94, %v88
    %v96 = vadd.f32 %v95, %v89
    %v97 = vadd.f32 %v96, %v90
    %v98 = vadd.f32 %v97, %v91
    %99 = vadd.xlane.f32.xlu0 %v98
    %v100 = vpop.xlane.xlu0 %99
    %v101 = vrot.slane %v100, 4
    %v102 = vadd.f32 %v100, %v101
    %v103 = vrot.slane %v102, 2
    %v104 = vadd.f32 %v102, %v103
    %v105 = vrot.slane %v104, 1
    %v106 = vadd.f32 %v104, %v105
    %s107 = vtos %v106
    %s108 = sadd.f32 %s83, %s107
    %s109 = scalar_lea.smem [#allocation2], 0
    %110 = sst [smem:[%s109]] %s108
    // Predicated region
    $region34: #{tpu_custom_call.1} parent=1 // pred_check
      %p111 = pneg %p53
    $region35: #{tpu_custom_call.1} parent=1 // pred_check_branch
      %113 = sbr.rel (%p111) target = $region37
    $region36: #{tpu_custom_call.1} parent=1 // pred_region
      %v114 = vld [vmem:[#allocation8] sm:$0xff]
      %v115 = vld [vmem:[%s3] sm:$0xff]
      %v116 = vadd.f32 %v115, 1.0
      %v117 = vmul.f32 %v114, %v114
      %v118 = vsub.f32 %v116, %v117
      %v119 = vmul.f32 %v115, 1.442695
      %v120 = vpow.pop %v119
      %v121 = vsub.f32 %v118, %v120
      %122 = vadd.xlane.f32.xlu0 %v121
      %v123 = vpop.xlane.xlu0 %122
      %v124 = vrot.slane %v123, 4
      %v125 = vadd.f32 %v123, %v124
      %v126 = vrot.slane %v125, 2
      %v127 = vadd.f32 %v125, %v126
      %v128 = vrot.slane %v127, 1
      %v129 = vadd.f32 %v127, %v128
      %s130 = vtos %v129
      %s131 = smul.f32 %s130, -0.5
      %s132 = sld [smem:[#allocation2]]
      %s133 = smul.f32 %s132, 0.001953125
      %s134 = sadd.f32 %s133, %s131
      %s135 = scalar_lea.smem [#allocation9], 0
      %136 = sst [smem:[%s135]] %s134
    $region37: #{tpu_custom_call.1} parent=1 // pred_fallthru
      _
    // Predicated region
    $region38: #{tpu_custom_call.1} parent=1 // pred_check
      _
    $region39: #{tpu_custom_call.1} parent=1 // pred_check_branch
      %138 = sbr.rel (0) target = $region41
    $region40: #{tpu_custom_call.1} parent=1 // pred_region
      %s140 = ssub.s32 16, 16
      %141 = vsyncadd [#allocation5], %s140
      %144 = dma.smem_to_hbm [#allocation9], 16, %s4, [#allocation5]
    $region41: #{tpu_custom_call.1} parent=1 // pred_fallthru
      _
    // Predicated region
    $region42: #{tpu_custom_call.1} parent=1 // pred_check
      _
    $region43: #{tpu_custom_call.1} parent=1 // pred_check_branch
      %146 = sbr.rel (0) target = $region45
    $region44: #{tpu_custom_call.1} parent=1 // pred_region
      %147 = dma.done [#allocation5], 16
    $region45: #{tpu_custom_call.1} parent=1 // pred_fallthru
      _
    %148 = sfence
    %149 = vsyncpa [#allocation4], 1
    %150 = vsyncpa [#allocation7], 1
    %151 = vsyncpa [#allocation5], 1

</llo_original>
